<compile_context>
chip_gen: v6e
topology: v6e:2x2x1
jax: 0.10.0
libtpu: 0.0.40
codegen_flags: <defaults>
</compile_context>

<pallas_src>
from typing import NamedTuple

import jax
import jax.numpy as jnp
from jax.experimental import pallas as pl
from jax.experimental.pallas import tpu as pltpu


_LANE = 128
_SUBLANE = 8
_TILE_CAP = 512            # 512-tiles fit default scoped VMEM on v5e/v6e/v7x
_SMALL_FLOPS = 1_000_000   # below this a plain XLA dot beats any pallas_call


def _round_up(x, m):
    return (x + m - 1) // m * m


def _pick_tile(dim, align, cap=_TILE_CAP):
    """Tile size: multiple of `align`, <= cap, minimizing padding (tie -> larger)."""
    if dim <= cap:
        return _round_up(dim, align)
    best_t, best_pad = None, None
    t = cap
    while t >= align:
        pad = _round_up(dim, t) - dim
        if best_pad is None or pad < best_pad:
            best_t, best_pad = t, pad
        t //= 2
    return best_t


class LinearParams(NamedTuple):
    """torch.nn.Linear params, prepared once for the Pallas kernel."""
    w_t: jax.Array   # [D_in, D_out]  compute dtype (unpadded, fast path)
    w_p: jax.Array   # [Kp,  Np]      compute dtype (padded, pallas path)
    b_v: jax.Array   # [D_out]        f32 (fast path)
    b_p: jax.Array   # [1, Np]        f32 (padded, pallas path)
    d_in: int
    d_out: int
    kp: int
    np_: int
    tk: int
    tn: int


def prepare_linear(weight, bias, compute_dtype=None):
    """One-time prep of nn.Linear params (PyTorch layout weight=[out, in]).

    Transposes to [in, out], optionally casts to a narrower MXU dtype (bf16
    recommended on v5e/v6e/v7x), and zero-pads to lane-dense tile multiples
    ONCE, so the per-call cost is only the activation pad + pallas_call.
    """
    d_out, d_in = weight.shape
    cdt = jnp.dtype(compute_dtype) if compute_dtype is not None else jnp.dtype(weight.dtype)

    tk = _pick_tile(d_in, _LANE)
    tn = _pick_tile(d_out, _LANE)
    kp = _round_up(d_in, tk)
    np_ = _round_up(d_out, tn)

    w_t = jnp.transpose(weight).astype(cdt)                     # [D_in, D_out]
    if kp > d_in or np_ > d_out:
        w_p = jnp.pad(w_t, ((0, kp - d_in), (0, np_ - d_out)))  # zeros inert in K
    else:
        w_p = w_t

    b_v = bias.astype(jnp.float32)
    b_p = jnp.pad(b_v.reshape(1, d_out), ((0, 0), (0, np_ - d_out)))

    return LinearParams(w_t, w_p, b_v, b_p, d_in, d_out, kp, np_, tk, tn)


def _linear_kernel_1k(x_ref, w_ref, b_ref, o_ref):
    """Single K-tile: no accumulator scratch, no pl.when, fused bias + cast."""
    o_ref[...] = (
        jnp.dot(x_ref[...], w_ref[...], preferred_element_type=jnp.float32)
        + b_ref[...]
    ).astype(o_ref.dtype)


def _linear_kernel_multik(x_ref, w_ref, b_ref, o_ref, acc_ref):
    """(i, j, k) grid step of y = x @ W + b with W already [D_in, D_out]."""
    k = pl.program_id(2)
    part = jnp.dot(x_ref[...], w_ref[...], preferred_element_type=jnp.float32)

    @pl.when(k == 0)
    def _():                 # init with first partial: saves a tm*tn zero store
        acc_ref[...] = part

    @pl.when(k > 0)
    def _():
        acc_ref[...] += part

    @pl.when(k == pl.num_programs(2) - 1)
    def _():                 # epilogue: bias add + cast once per (i, j) tile
        o_ref[...] = (acc_ref[...] + b_ref[...]).astype(o_ref.dtype)


def linear_pallas(x, params: LinearParams, *, force_pallas=False):
    """Classifier.seqModel: y = x @ weight.T + bias (torch.nn.Linear semantics)."""
    B, d_in = x.shape
    assert d_in == params.d_in, "weight in_features must match x feature dim"
    out_dtype = x.dtype
    cdt = params.w_t.dtype

    # ---- tile plan: lane-dense (128-multiple) last dims, 8-multiple sublanes,
    # tm chosen to minimize batch padding; tn/tk fixed at prepare time.
    tm = _pick_tile(B, _SUBLANE)
    bp = _round_up(B, tm)
    kp, np_, tk, tn = params.kp, params.np_, params.tk, params.tn
    grid = (bp // tm, np_ // tn, kp // tk)

    flops = 2 * B * d_in * params.d_out
    tiny = flops < _SMALL_FLOPS or grid == (1, 1, 1)
    if tiny and not force_pallas:
        # Small-problem fast path: the ~0.35 us/step launch cost plus pad/slice
        # ops dwarf the compute; let XLA fuse a plain dot instead.
        y = jnp.dot(x.astype(cdt), params.w_t, preferred_element_type=jnp.float32)
        return (y + params.b_v).astype(out_dtype)

    # Explicit operand cast (no silent in-kernel promotion), pad activations.
    x_c = x.astype(cdt)
    if bp > B or kp > d_in:
        x_c = jnp.pad(x_c, ((0, bp - B), (0, kp - d_in)))

    in_item = jnp.dtype(cdt).itemsize
    out_item = jnp.dtype(out_dtype).itemsize
    cost = pl.CostEstimate(
        flops=2 * bp * kp * np_,
        transcendentals=0,
        # Revisit factors: x is streamed once per output-column tile (grid[1]),
        # W once per output-row tile (grid[0]).
        bytes_accessed=(grid[1] * bp * kp + grid[0] * kp * np_) * in_item
        + grid[0] * np_ * 4
        + bp * np_ * out_item,
    )

    if grid[2] == 1:
        y_p = pl.pallas_call(
            _linear_kernel_1k,
            out_shape=jax.ShapeDtypeStruct((bp, np_), out_dtype),
            grid_spec=pltpu.PrefetchScalarGridSpec(
                num_scalar_prefetch=0,
                grid=(grid[0], grid[1]),
                in_specs=[
                    pl.BlockSpec((tm, tk), lambda i, j: (i, 0)),   # x tile
                    pl.BlockSpec((tk, tn), lambda i, j: (0, j)),   # W tile
                    pl.BlockSpec((1, tn), lambda i, j: (0, j)),    # bias tile
                ],
                out_specs=pl.BlockSpec((tm, tn), lambda i, j: (i, j)),
            ),
            compiler_params=pltpu.CompilerParams(
                dimension_semantics=("parallel", "parallel"),
            ),
            cost_estimate=cost,
        )(x_c, params.w_p, params.b_p)
    else:
        y_p = pl.pallas_call(
            _linear_kernel_multik,
            out_shape=jax.ShapeDtypeStruct((bp, np_), out_dtype),
            grid_spec=pltpu.PrefetchScalarGridSpec(
                num_scalar_prefetch=0,
                grid=grid,
                in_specs=[
                    pl.BlockSpec((tm, tk), lambda i, j, k: (i, k)),   # x tile
                    pl.BlockSpec((tk, tn), lambda i, j, k: (k, j)),   # W tile
                    pl.BlockSpec((1, tn), lambda i, j, k: (0, j)),    # bias tile
                ],
                out_specs=pl.BlockSpec((tm, tn), lambda i, j, k: (i, j)),
                scratch_shapes=[pltpu.VMEM((tm, tn), jnp.float32)],
            ),
            compiler_params=pltpu.CompilerParams(
                # batch / out-feature axes "parallel" (2-TC sharding on v7x),
                # contraction axis last and "arbitrary" (resident accumulator).
                dimension_semantics=("parallel", "parallel", "arbitrary"),
            ),
            cost_estimate=cost,
        )(x_c, params.w_p, params.b_p)

    if bp > B or np_ > params.d_out:
        y_p = y_p[:B, :params.d_out]
    return y_p


# TODO(synk): Classifier.forward / pairForward / batchForward* raise
# NotImplementedError, and pairBatchForward calls an sklearn clf.predict on a
# classifier that is never constructed; only the seqModel Linear layer has a
# Pallas equivalent.


if __name__ == "__main__":
    # Small shapes consistent with the module: inputDim=32, batch=8
    input_dim = 32
    batch = 8

    key = jax.random.PRNGKey(0)
    kx, kw, kb = jax.random.split(key, 3)

    x = jax.random.normal(kx, (batch, input_dim), dtype=jnp.float32)

    # Deterministic nn.Linear-style init: U(-1/sqrt(fan_in), 1/sqrt(fan_in))
    bound = 1.0 / jnp.sqrt(jnp.float32(input_dim))
    weight = jax.random.uniform(
        kw, (input_dim, input_dim), dtype=jnp.float32, minval=-bound, maxval=bound
    )
    bias = jax.random.uniform(
        kb, (input_dim,), dtype=jnp.float32, minval=-bound, maxval=bound
    )

    # Plain-JAX reference of torch.nn.Linear.
    y_ref = x @ weight.T + bias

    # Weight prepared ONCE (transpose + pad cached across calls).
    params_f32 = prepare_linear(weight, bias)

    # 1) Deployment path at toy shapes: small-problem fast path (XLA dot).
    y_fast = jax.block_until_ready(linear_pallas(x, params_f32))
    assert y_fast.shape == (batch, input_dim)
    assert jnp.allclose(y_fast, y_ref, atol=1e-5, rtol=1e-5)

    # 2) Force the Pallas path (single-K-tile kernel, grid (1, 1)) and validate.
    y_pal = jax.block_until_ready(linear_pallas(x, params_f32, force_pallas=True))
    assert y_pal.shape == (batch, input_dim)
    assert jnp.allclose(y_pal, y_ref, atol=1e-5, rtol=1e-5)

    # 3) bf16 operands for the MXU (f32 accumulate) — recommended on
    #    v5e/v6e/v7x; looser tolerance due to bf16 input quantization.
    params_bf16 = prepare_linear(weight, bias, compute_dtype=jnp.bfloat16)
    y_bf = jax.block_until_ready(linear_pallas(x, params_bf16, force_pallas=True))
    assert y_bf.shape == (batch, input_dim)
    assert y_bf.dtype == x.dtype
    assert jnp.allclose(y_bf, y_ref, atol=5e-2, rtol=5e-2)

    print("KERNEL_OK")
</pallas_src>

<mosaic_0001>
module attributes {stable_mosaic.version = 11 : i64} {
  func.func @_linear_kernel_1k(%arg0: i32, %arg1: i32, %arg2: memref<8x128xf32, #tpu.memory_space<vmem>>, %arg3: memref<128x128xf32, #tpu.memory_space<vmem>>, %arg4: memref<1x128xf32, #tpu.memory_space<vmem>>, %arg5: memref<8x128xf32, #tpu.memory_space<vmem>>) attributes {dimension_semantics = [#tpu.dimension_semantics<parallel>, #tpu.dimension_semantics<parallel>], iteration_bounds = array<i64: 1, 1>, scalar_prefetch = 0 : i64, scratch_operands = 0 : i64, tpu.core_type = #tpu.core_type<tc>, window_params = [{transform_indices = @transform_0, window_bounds = array<i64: 8, 128>}, {transform_indices = @transform_1, window_bounds = array<i64: 128, 128>}, {transform_indices = @transform_2, window_bounds = array<i64: 1, 128>}, {transform_indices = @transform_3, window_bounds = array<i64: 8, 128>}]} {
    %c0 = arith.constant 0 : index
    %c0_0 = arith.constant 0 : index
    %0 = vector.load %arg2[%c0, %c0_0] : memref<8x128xf32, #tpu.memory_space<vmem>>, vector<8x128xf32>
    %c0_1 = arith.constant 0 : index
    %c0_2 = arith.constant 0 : index
    %1 = vector.load %arg3[%c0_1, %c0_2] : memref<128x128xf32, #tpu.memory_space<vmem>>, vector<128x128xf32>
    %cst = arith.constant dense<0.000000e+00> : vector<8x128xf32>
    %2 = tpu.matmul %0, %1, %cst {dimension_numbers = #tpu.dot_dimension_numbers<[1], [0], [0], [1], [0, 0, 1, 1], [], []>} : vector<8x128xf32>, vector<128x128xf32>, vector<8x128xf32> -> vector<8x128xf32>
    %c0_3 = arith.constant 0 : index
    %c0_4 = arith.constant 0 : index
    %3 = vector.load %arg4[%c0_3, %c0_4] : memref<1x128xf32, #tpu.memory_space<vmem>>, vector<1x128xf32>
    %4 = vector.broadcast %3 : vector<1x128xf32> to vector<8x128xf32>
    %5 = arith.addf %2, %4 : vector<8x128xf32>
    %c0_5 = arith.constant 0 : index
    %c0_6 = arith.constant 0 : index
    %6 = vector.load %arg5[%c0_5, %c0_6] : memref<8x128xf32, #tpu.memory_space<vmem>>, vector<8x128xf32>
    tpu.vector_store %arg5[%c0_5, %c0_6], %5 {strides = array<i32>} : memref<8x128xf32, #tpu.memory_space<vmem>>, vector<8x128xf32>,
    return
  }
  func.func @transform_0(%arg0: i32, %arg1: i32) -> (i32, i32) {
    %c0_i32 = arith.constant 0 : i32
    %c0_i32_0 = arith.constant 0 : i32
    return %arg0, %c0_i32 : i32, i32
  }
  func.func @transform_1(%arg0: i32, %arg1: i32) -> (i32, i32) {
    %c0_i32 = arith.constant 0 : i32
    %c0_i32_0 = arith.constant 0 : i32
    return %c0_i32, %arg1 : i32, i32
  }
  func.func @transform_2(%arg0: i32, %arg1: i32) -> (i32, i32) {
    %c0_i32 = arith.constant 0 : i32
    %c0_i32_0 = arith.constant 0 : i32
    return %c0_i32, %arg1 : i32, i32
  }
  func.func @transform_3(%arg0: i32, %arg1: i32) -> (i32, i32) {
    %c0_i32 = arith.constant 0 : i32
    return %arg0, %arg1 : i32, i32
  }
}

</mosaic_0001>

<llo_original>
// kernel: tpu_custom_call.1
$region0: #{tpu_custom_call.1}
  #allocation0 [shape = 'u32[]', space=smem, size = 0x4, offset = 0x4, fixed_abs, tag = 'smem constant byte address 0x4 - core index']
  #allocation1 [shape = 'u32[144,128]{1,0:T(1,128)}', space=vmem, size = 0x12000, scoped, tag = 'internal scratch']
  %s0 = inlined_call_operand.hbm [shape: f32[8,128], index: 0, kind: input, shape index: {}]
  %s1 = inlined_call_operand.hbm [shape: f32[128,128], index: 1, kind: input, shape index: {}]
  %s2 = inlined_call_operand.vmem [shape: f32[1,128], index: 2, kind: input, shape index: {}]
  %s3 = inlined_call_operand.hbm [shape: f32[8,128], index: 3, kind: output, shape index: {}]
  %s4 = sld [smem:[#allocation0]]
  $region30: #{tpu_custom_call.1} parent=0
    _
  %s6 = ssub.s32 1, %s4
  %s7 = scalar_select 0, %s6, %s4
  $region1: #{tpu_custom_call.1} parent=0
    #allocation2 [shape = 'u8[4096]{0}', space=vmem, size = 0x1000, scoped, tag = 'input window, operand 0, single buffered']
    #allocation3 [shape = 's32[1]{0}', space=sflag, size = 0x4, scoped, tag = 'scoped memory for tpu_custom_call.1']
    #allocation4 [shape = 's32[1]{0}', space=sflag, size = 0x4, scoped, tag = 'scoped memory for tpu_custom_call.1']
    #allocation5 [shape = 'u8[65536]{0}', space=vmem, size = 0x10000, scoped, tag = 'input window, operand 1, single buffered']
    #allocation6 [shape = 's32[1]{0}', space=sflag, size = 0x4, scoped, tag = 'scoped memory for tpu_custom_call.1']
    #allocation7 [shape = 'u8[4096]{0}', space=vmem, size = 0x1000, scoped, tag = 'output window, operand 0, single buffered']
    %8 = vsyncpa [#allocation3], 0
    %9 = vsyncpa [#allocation6], 0
    %10 = vsyncpa [#allocation4], 0
    // Predicated region
    $region2: #{tpu_custom_call.1} parent=1 // pred_check
      _
    $region3: #{tpu_custom_call.1} parent=1 // pred_check_branch
      %12 = sbr.rel (0) target = $region5
    $region4: #{tpu_custom_call.1} parent=1 // pred_region
      %s14 = ssub.s32 128, 128
      %15 = vsyncadd [#allocation3], %s14
      %s17 = sshll.u32 [#allocation2], 4
      %s18 = int_to_ptr.vmem [resolvable:$true] %s17
      %20 = dma.hbm_to_vmem [thread:$0]  %s0, 128, %s18, [#allocation3]
    $region5: #{tpu_custom_call.1} parent=1 // pred_fallthru
      _
    // Predicated region
    $region6: #{tpu_custom_call.1} parent=1 // pred_check
      _
    $region7: #{tpu_custom_call.1} parent=1 // pred_check_branch
      %22 = sbr.rel (0) target = $region9
    $region8: #{tpu_custom_call.1} parent=1 // pred_region
      %s24 = ssub.s32 2048, 2048
      %25 = vsyncadd [#allocation6], %s24
      %s26 = sshll.u32 [#allocation5], 4
      %s27 = int_to_ptr.vmem [resolvable:$true] %s26
      %32 = dma.hbm_to_vmem [thread:$0]  %s1, 2048, %s27, [#allocation6], 128, 128, 8
    $region9: #{tpu_custom_call.1} parent=1 // pred_fallthru
      _
    // Predicated region
    $region10: #{tpu_custom_call.1} parent=1 // pred_check
      _
    $region11: #{tpu_custom_call.1} parent=1 // pred_check_branch
      %34 = sbr.rel (0) target = $region13
    $region12: #{tpu_custom_call.1} parent=1 // pred_region
      _
    $region13: #{tpu_custom_call.1} parent=1 // pred_fallthru
      _
    // Predicated region
    $region14: #{tpu_custom_call.1} parent=1 // pred_check
      _
    $region15: #{tpu_custom_call.1} parent=1 // pred_check_branch
      %36 = sbr.rel (0) target = $region17
    $region16: #{tpu_custom_call.1} parent=1 // pred_region
      %37 = dma.done [#allocation3], 128
    $region17: #{tpu_custom_call.1} parent=1 // pred_fallthru
      _
    // Predicated region
    $region18: #{tpu_custom_call.1} parent=1 // pred_check
      _
    $region19: #{tpu_custom_call.1} parent=1 // pred_check_branch
      %39 = sbr.rel (0) target = $region21
    $region20: #{tpu_custom_call.1} parent=1 // pred_region
      %40 = dma.done [#allocation6], 2048
    $region21: #{tpu_custom_call.1} parent=1 // pred_fallthru
      _
    %v41 = vld [vmem:[#allocation2] sm:$0xff]
    %v42 = vld [vmem:[#allocation5] sm:$0xff]
    %v43 = vld [vmem:[#allocation5 + $0x8] sm:$0xff]
    %v44 = vld [vmem:[#allocation5 + $0x10] sm:$0xff]
    %v45 = vld [vmem:[#allocation5 + $0x18] sm:$0xff]
    %v46 = vld [vmem:[#allocation5 + $0x20] sm:$0xff]
    %v47 = vld [vmem:[#allocation5 + $0x28] sm:$0xff]
    %v48 = vld [vmem:[#allocation5 + $0x30] sm:$0xff]
    %v49 = vld [vmem:[#allocation5 + $0x38] sm:$0xff]
    %v50 = vld [vmem:[#allocation5 + $0x40] sm:$0xff]
    %v51 = vld [vmem:[#allocation5 + $0x48] sm:$0xff]
    %v52 = vld [vmem:[#allocation5 + $0x50] sm:$0xff]
    %v53 = vld [vmem:[#allocation5 + $0x58] sm:$0xff]
    %v54 = vld [vmem:[#allocation5 + $0x60] sm:$0xff]
    %v55 = vld [vmem:[#allocation5 + $0x68] sm:$0xff]
    %v56 = vld [vmem:[#allocation5 + $0x70] sm:$0xff]
    %v57 = vld [vmem:[#allocation5 + $0x78] sm:$0xff]
    %v58 = vld [vmem:[%s2] sm:$0x1]
    %v60 = vlaneseq
    %v61 = vshrl.u32 %v60, 7
    %v62 = vsub.s32 0, %v61
    %v63 = vrot.slane %v58, %v62
    %65 = vmatprep.subr.mxu0 0.0
    %66 = vmatpush1.msra.mxu0 %v57
    %67 = vmatprep.subr.mxu0 0.0
    %68 = vmatpush1.msra.mxu0 %v56
    %69 = vmatprep.subr.mxu0 0.0
    %70 = vmatpush1.msra.mxu0 %v55
    %71 = vmatprep.subr.mxu0 0.0
    %72 = vmatpush1.msra.mxu0 %v54
    %73 = vmatprep.subr.mxu0 0.0
    %74 = vmatpush1.msra.mxu0 %v53
    %75 = vmatprep.subr.mxu0 0.0
    %76 = vmatpush1.msra.mxu0 %v52
    %77 = vmatprep.subr.mxu0 0.0
    %78 = vmatpush1.msra.mxu0 %v51
    %79 = vmatprep.subr.mxu0 0.0
    %80 = vmatpush1.msra.mxu0 %v50
    %81 = vmatprep.subr.mxu0 0.0
    %82 = vmatpush1.msra.mxu0 %v49
    %83 = vmatprep.subr.mxu0 0.0
    %84 = vmatpush1.msra.mxu0 %v48
    %85 = vmatprep.subr.mxu0 0.0
    %86 = vmatpush1.msra.mxu0 %v47
    %87 = vmatprep.subr.mxu0 0.0
    %88 = vmatpush1.msra.mxu0 %v46
    %89 = vmatprep.subr.mxu0 0.0
    %90 = vmatpush1.msra.mxu0 %v45
    %91 = vmatprep.subr.mxu0 0.0
    %92 = vmatpush1.msra.mxu0 %v44
    %93 = vmatprep.subr.mxu0 0.0
    %94 = vmatpush1.msra.mxu0 %v43
    %95 = vmatprep.subr.mxu0 0.0
    %96 = vmatpush1.msra.mxu0 %v42
    %97 = vmatprep.subr.mxu0 0.0
    %98 = vmatpush2.msra.mxu0 0.0
    %99 = vmatprep.subr.mxu0 0.0
    %100 = vmatpush2.msra.mxu0 0.0
    %101 = vmatprep.subr.mxu0 0.0
    %102 = vmatpush2.msra.mxu0 0.0
    %103 = vmatprep.subr.mxu0 0.0
    %104 = vmatpush2.msra.mxu0 0.0
    %105 = vmatprep.subr.mxu0 0.0
    %106 = vmatpush2.msra.mxu0 0.0
    %107 = vmatprep.subr.mxu0 0.0
    %108 = vmatpush2.msra.mxu0 0.0
    %109 = vmatprep.subr.mxu0 0.0
    %110 = vmatpush2.msra.mxu0 0.0
    %111 = vmatprep.subr.mxu0 0.0
    %112 = vmatpush2.msra.mxu0 0.0
    %113 = vmatprep.subr.mxu0 0.0
    %114 = vmatpush2.msra.mxu0 0.0
    %115 = vmatprep.subr.mxu0 0.0
    %116 = vmatpush2.msra.mxu0 0.0
    %117 = vmatprep.subr.mxu0 0.0
    %118 = vmatpush2.msra.mxu0 0.0
    %119 = vmatprep.subr.mxu0 0.0
    %120 = vmatpush2.msra.mxu0 0.0
    %121 = vmatprep.subr.mxu0 0.0
    %122 = vmatpush2.msra.mxu0 0.0
    %123 = vmatprep.subr.mxu0 0.0
    %124 = vmatpush2.msra.mxu0 0.0
    %125 = vmatprep.subr.mxu0 0.0
    %126 = vmatpush2.msra.mxu0 0.0
    %127 = vmatprep.subr.mxu0 0.0
    %128 = vmatpush2.msra.mxu0 0.0
    %129 = vmatprep.mubr.f32.mxu0 0.0
    %130 = vmatmul.mubr.f32.gmra.mxu0 %v41
    %v131 = vpop.f32.mrf.mxu0
    %v132 = vadd.f32 %v63, %v131
    %v133 = vpop.f32.mrf.mxu0
    %134 = vdwg.mxu0
    %135 = vst [vmem:[#allocation7] sm:$0xff] %v132
    // Predicated region
    $region22: #{tpu_custom_call.1} parent=1 // pred_check
      _
    $region23: #{tpu_custom_call.1} parent=1 // pred_check_branch
      %137 = sbr.rel (0) target = $region25
    $region24: #{tpu_custom_call.1} parent=1 // pred_region
      %s139 = ssub.s32 128, 128
      %140 = vsyncadd [#allocation4], %s139
      %s142 = sshll.u32 [#allocation7], 4
      %s143 = int_to_ptr.vmem [resolvable:$true] %s142
      %145 = dma.vmem_to_hbm [thread:$0]  %s143, 128, %s3, [#allocation4]
    $region25: #{tpu_custom_call.1} parent=1 // pred_fallthru
      _
    // Predicated region
    $region26: #{tpu_custom_call.1} parent=1 // pred_check
      _
    $region27: #{tpu_custom_call.1} parent=1 // pred_check_branch
      %147 = sbr.rel (0) target = $region29
    $region28: #{tpu_custom_call.1} parent=1 // pred_region
      %148 = dma.done [#allocation4], 128
    $region29: #{tpu_custom_call.1} parent=1 // pred_fallthru
      _
    %149 = vsyncpa [#allocation3], 1
    %150 = vsyncpa [#allocation6], 1
    %151 = vsyncpa [#allocation4], 1

</llo_original>
